<compile_context>
chip_gen: v5e
topology: v5e:2x2
jax: 0.10.0
libtpu: 0.0.40
codegen_flags: <defaults>
</compile_context>

<pallas_src>
import functools

import jax
import jax.numpy as jnp
from jax import lax
from jax.experimental import pallas as pl
from jax.experimental.pallas import tpu as pltpu


def _channel_attention_kernel(x_ref, w1t_ref, w2t_ref, out_ref, acc_ref,
                              *, n_total, tn, tb, sub):
    # x_ref:   (TB, TN, C)  TB batch rows, one N tile
    # w1t_ref: (C, H)       pre-transposed Conv1d(C->H,1) weight
    # w2t_ref: (H, C)       pre-transposed Conv1d(H->C,1) weight
    # out_ref: (TB, 1, C)
    # acc_ref: (2, TB, SUB, C) f32 scratch; row 0 = running sum, row 1 = running max
    n_idx = pl.program_id(1)
    n_steps = pl.num_programs(1)
    c = x_ref.shape[-1]

    @pl.when(n_idx == 0)
    def _init():
        acc_ref[0] = jnp.zeros((tb, sub, c), jnp.float32)
        acc_ref[1] = jnp.full((tb, sub, c), -jnp.inf, jnp.float32)

    x = x_ref[...].astype(jnp.float32)                     # (TB, TN, C)

    def _accumulate(x_sum, x_max):
        # Group rows into SUB sublane slots; only VPU add/max per tile.  The
        # cross-sublane collapse is deferred to the finalize step.
        xs = x_sum.reshape(tb, tn // sub, sub, c)
        xm = x_max.reshape(tb, tn // sub, sub, c)
        acc_ref[0] = acc_ref[0] + jnp.sum(xs, axis=1)                 # (TB, SUB, C)
        acc_ref[1] = jnp.maximum(acc_ref[1], jnp.max(xm, axis=1))     # (TB, SUB, C)

    if n_total % tn == 0:
        # No ragged tile: never pay the mask.
        _accumulate(x, x)
    else:
        @pl.when(n_idx < n_steps - 1)
        def _full_tile():
            _accumulate(x, x)

        @pl.when(n_idx == n_steps - 1)
        def _ragged_tile():
            row = lax.broadcasted_iota(jnp.int32, x.shape, 1)
            valid = (n_idx * tn + row) < n_total
            _accumulate(jnp.where(valid, x, 0.0),
                        jnp.where(valid, x, -jnp.inf))

    @pl.when(n_idx == n_steps - 1)
    def _finalize():
        avg = jnp.sum(acc_ref[0], axis=1) * (1.0 / n_total)           # (TB, C)
        mx = jnp.max(acc_ref[1], axis=1)                              # (TB, C)
        pooled = jnp.concatenate([avg, mx], axis=0)                   # (2*TB, C)
        h = jnp.maximum(
            jnp.dot(pooled, w1t_ref[...], preferred_element_type=jnp.float32), 0.0)
        y = jnp.dot(h, w2t_ref[...], preferred_element_type=jnp.float32)  # (2*TB, C)
        out = jax.nn.sigmoid(y[:tb, :] + y[tb:, :])                   # (TB, C)
        out_ref[...] = out[:, None, :].astype(out_ref.dtype)          # (TB, 1, C)


def channel_attention(x, w1, w2, *, tn=None, x_vmem_budget_bytes=8 * 1024 * 1024):
    """x: (B, N, C); w1: (H, C) = Conv1d(C->H,1).weight.squeeze(-1); w2: (C, H).

    x may be float32 or bfloat16; it is streamed in its native dtype and upcast
    to float32 per tile inside the kernel.
    """
    B, N, C = x.shape
    H = w1.shape[0]
    assert w1.shape == (H, C) and w2.shape == (C, H)

    itemsize = jnp.dtype(x.dtype).itemsize
    # Sublane multiple for the streamed N-tile (sub-32-bit dtypes pack 2x per sublane).
    req = 8 if itemsize >= 4 else 16
    # Bytes per streamed row: double-buffered native block + the in-kernel f32 temp.
    row_bytes = C * (2 * itemsize + 4)

    # --- Tile size from the VMEM byte budget -------------------------------
    if tn is None:
        tn = max(req, x_vmem_budget_bytes // max(row_bytes, 1))
        tn = min(tn, 2048)
    tn = int(tn)
    if tn >= N:
        tn = N
    else:
        tn = max(req, (tn // req) * req)
        if tn >= N:
            tn = N
        else:
            # Prefer a tile that divides N so the ragged-tile mask is never needed.
            for cand in range(tn, max(req, tn // 2) - 1, -req):
                if N % cand == 0:
                    tn = cand
                    break
    n_tiles = pl.cdiv(N, tn)

    # --- Batch blocking when the whole sequence fits in one tile -----------
    tb = 1
    if tn == N:
        for cand in range(B, 0, -1):
            if B % cand == 0 and cand * N * row_bytes <= x_vmem_budget_bytes:
                tb = cand
                break

    sub = 8 if tn % 8 == 0 else 1

    # Pre-transpose the 1x1-conv weights once on the host (no in-kernel transpose).
    w1t = jnp.asarray(w1).T    # (C, H)
    w2t = jnp.asarray(w2).T    # (H, C)

    # --- Scoped-VMEM estimate -> explicit limit (safe on v5e/v6e/v7x) ------
    est = (2 * tb * tn * C * itemsize      # double-buffered x block (native dtype)
           + tb * tn * C * 4               # f32 upcast temp
           + 2 * 2 * C * H * 4             # both weights, double-buffered
           + 2 * tb * sub * C * 4          # accumulator scratch
           + 2 * tb * C * 4)               # output block, double-buffered
    vmem_limit = int(min(max(2 * est, 32 * 1024 * 1024), 48 * 1024 * 1024))

    kernel = functools.partial(_channel_attention_kernel,
                               n_total=N, tn=tn, tb=tb, sub=sub)

    return pl.pallas_call(
        kernel,
        out_shape=jax.ShapeDtypeStruct((B, 1, C), jnp.float32),
        grid=(B // tb, n_tiles),
        in_specs=[
            pl.BlockSpec((tb, tn, C), lambda b, n: (b, n, 0)),   # streamed x tiles
            pl.BlockSpec((C, H), lambda b, n: (0, 0)),           # resident weights
            pl.BlockSpec((H, C), lambda b, n: (0, 0)),
        ],
        out_specs=pl.BlockSpec((tb, 1, C), lambda b, n: (b, 0, 0)),
        scratch_shapes=[
            pltpu.VMEM((2, tb, sub, C), jnp.float32),   # [0]=running sum, [1]=running max
        ],
        compiler_params=pltpu.CompilerParams(
            dimension_semantics=("parallel", "arbitrary"),
            vmem_limit_bytes=vmem_limit),
    )(x, w1t, w2t)


def channel_attention_ref(x, w1, w2):
    # Pure-JAX reference mirroring the PyTorch forward (computed in f32).
    xf = x.astype(jnp.float32)
    avg = jnp.mean(xf, axis=1)
    mx = jnp.max(xf, axis=1)

    def fc(v):
        return jnp.maximum(v @ w1.T, 0.0) @ w2.T

    return jax.nn.sigmoid(fc(avg) + fc(mx))[:, None, :]


if __name__ == "__main__":
    key = jax.random.PRNGKey(0)
    kx, k1, k2 = jax.random.split(key, 3)

    # Small shapes consistent with the module: in_planes (C) must be >= 16.
    B, C = 2, 64
    H = C // 16  # = 4
    # Conv1d(C, H, 1) weight (H, C, 1) -> (H, C); Conv1d(H, C, 1) weight (C, H, 1) -> (C, H)
    w1 = jax.random.normal(k1, (H, C), dtype=jnp.float32) * 0.1
    w2 = jax.random.normal(k2, (C, H), dtype=jnp.float32) * 0.1

    # Case 1: small N, f32 -> whole-N tile + batch blocking (TB == B, one grid step).
    N1 = 48
    x1 = jax.random.normal(kx, (B, N1, C), dtype=jnp.float32)
    out1 = jax.block_until_ready(channel_attention(x1, w1, w2))
    ref1 = channel_attention_ref(x1, w1, w2)
    assert out1.shape == (B, 1, C)
    assert jnp.allclose(out1, ref1, atol=1e-4, rtol=1e-4), "case1 mismatch vs reference"

    # Case 2: forced small TN with ragged N -> exercises the streamed reduction grid
    # and the masked-last-tile path.
    N2 = 50
    x2 = jax.random.normal(kx, (B, N2, C), dtype=jnp.float32)
    out2 = jax.block_until_ready(channel_attention(x2, w1, w2, tn=16))
    ref2 = channel_attention_ref(x2, w1, w2)
    assert jnp.allclose(out2, ref2, atol=1e-4, rtol=1e-4), "case2 mismatch vs reference"

    # Case 3: bf16 activations streamed in native dtype (halved HBM bytes), f32 math inside.
    x3 = x1.astype(jnp.bfloat16)
    out3 = jax.block_until_ready(channel_attention(x3, w1, w2))
    ref3 = channel_attention_ref(x3, w1, w2)
    assert jnp.allclose(out3, ref3, atol=1e-3, rtol=1e-3), "case3 mismatch vs reference"

    print("KERNEL_OK")
</pallas_src>

<mosaic_0001>
module attributes {stable_mosaic.version = 11 : i64} {
  func.func @_channel_attention_kernel(%arg0: i32, %arg1: i32, %arg2: memref<2x48x64xf32, #tpu.memory_space<vmem>>, %arg3: memref<64x4xf32, #tpu.memory_space<vmem>>, %arg4: memref<4x64xf32, #tpu.memory_space<vmem>>, %arg5: memref<2x1x64xf32, #tpu.memory_space<vmem>>, %arg6: memref<2x2x8x64xf32, #tpu.memory_space<vmem>>) attributes {dimension_semantics = [#tpu.dimension_semantics<parallel>, #tpu.dimension_semantics<arbitrary>], iteration_bounds = array<i64: 1, 1>, scalar_prefetch = 0 : i64, scratch_operands = 1 : i64, tpu.core_type = #tpu.core_type<tc>, window_params = [{transform_indices = @transform_0, window_bounds = array<i64: 2, 48, 64>}, {pipeline_mode = #tpu.pipeline_mode<synchronous>, transform_indices = @transform_1, window_bounds = array<i64: 64, 4>}, {pipeline_mode = #tpu.pipeline_mode<synchronous>, transform_indices = @transform_2, window_bounds = array<i64: 4, 64>}, {transform_indices = @transform_3, window_bounds = array<i64: 2, 1, 64>}]} {
    %c0_i32 = arith.constant 0 : i32
    %0 = arith.cmpi eq, %arg1, %c0_i32 : i32
    %1 = arith.extui %0 : i1 to i32
    %c0_i32_0 = arith.constant 0 : i32
    %2 = arith.cmpi ne, %1, %c0_i32_0 : i32
    scf.if %2 {
      %cst_21 = arith.constant 0.000000e+00 : f32
      %23 = vector.broadcast %cst_21 : f32 to vector<2x8x64xf32>
      %c0_22 = arith.constant 0 : index
      %c0_23 = arith.constant 0 : index
      %c0_24 = arith.constant 0 : index
      %c0_25 = arith.constant 0 : index
      %24 = vector.load %arg6[%c0_22, %c0_23, %c0_24, %c0_25] : memref<2x2x8x64xf32, #tpu.memory_space<vmem>>, vector<1x2x8x64xf32>
      %25 = vector.shape_cast %24 : vector<1x2x8x64xf32> to vector<2x8x64xf32>
      %26 = vector.shape_cast %23 : vector<2x8x64xf32> to vector<1x2x8x64xf32>
      tpu.vector_store %arg6[%c0_22, %c0_23, %c0_24, %c0_25], %26 {strides = array<i32>} : memref<2x2x8x64xf32, #tpu.memory_space<vmem>>, vector<1x2x8x64xf32>,
      %cst_26 = arith.constant 0xFF800000 : f32
      %27 = vector.broadcast %cst_26 : f32 to vector<2x8x64xf32>
      %c1_27 = arith.constant 1 : index
      %c0_28 = arith.constant 0 : index
      %c0_29 = arith.constant 0 : index
      %c0_30 = arith.constant 0 : index
      %28 = vector.load %arg6[%c1_27, %c0_28, %c0_29, %c0_30] : memref<2x2x8x64xf32, #tpu.memory_space<vmem>>, vector<1x2x8x64xf32>
      %29 = vector.shape_cast %28 : vector<1x2x8x64xf32> to vector<2x8x64xf32>
      %30 = vector.shape_cast %27 : vector<2x8x64xf32> to vector<1x2x8x64xf32>
      tpu.vector_store %arg6[%c1_27, %c0_28, %c0_29, %c0_30], %30 {strides = array<i32>} : memref<2x2x8x64xf32, #tpu.memory_space<vmem>>, vector<1x2x8x64xf32>,
    } else {
    }
    %c0 = arith.constant 0 : index
    %c0_1 = arith.constant 0 : index
    %c0_2 = arith.constant 0 : index
    %3 = vector.load %arg2[%c0, %c0_1, %c0_2] : memref<2x48x64xf32, #tpu.memory_space<vmem>>, vector<2x48x64xf32>
    %4 = vector.shape_cast %3 : vector<2x48x64xf32> to vector<2x6x8x64xf32>
    %5 = vector.shape_cast %3 : vector<2x48x64xf32> to vector<2x6x8x64xf32>
    %c0_3 = arith.constant 0 : index
    %c0_4 = arith.constant 0 : index
    %c0_5 = arith.constant 0 : index
    %c0_6 = arith.constant 0 : index
    %6 = vector.load %arg6[%c0_3, %c0_4, %c0_5, %c0_6] : memref<2x2x8x64xf32, #tpu.memory_space<vmem>>, vector<1x2x8x64xf32>
    %7 = vector.shape_cast %6 : vector<1x2x8x64xf32> to vector<2x8x64xf32>
    %cst = arith.constant dense<0.000000e+00> : vector<2x8x64xf32>
    %8 = vector.multi_reduction <add>, %4, %cst [1] : vector<2x6x8x64xf32> to vector<2x8x64xf32>
    %9 = arith.addf %7, %8 : vector<2x8x64xf32>
    %c0_7 = arith.constant 0 : index
    %c0_8 = arith.constant 0 : index
    %c0_9 = arith.constant 0 : index
    %c0_10 = arith.constant 0 : index
    %10 = vector.load %arg6[%c0_7, %c0_8, %c0_9, %c0_10] : memref<2x2x8x64xf32, #tpu.memory_space<vmem>>, vector<1x2x8x64xf32>
    %11 = vector.shape_cast %10 : vector<1x2x8x64xf32> to vector<2x8x64xf32>
    %12 = vector.shape_cast %9 : vector<2x8x64xf32> to vector<1x2x8x64xf32>
    tpu.vector_store %arg6[%c0_7, %c0_8, %c0_9, %c0_10], %12 {strides = array<i32>} : memref<2x2x8x64xf32, #tpu.memory_space<vmem>>, vector<1x2x8x64xf32>,
    %c1 = arith.constant 1 : index
    %c0_11 = arith.constant 0 : index
    %c0_12 = arith.constant 0 : index
    %c0_13 = arith.constant 0 : index
    %13 = vector.load %arg6[%c1, %c0_11, %c0_12, %c0_13] : memref<2x2x8x64xf32, #tpu.memory_space<vmem>>, vector<1x2x8x64xf32>
    %14 = vector.shape_cast %13 : vector<1x2x8x64xf32> to vector<2x8x64xf32>
    %cst_14 = arith.constant dense<0xFF800000> : vector<2x8x64xf32>
    %15 = vector.multi_reduction <maximumf>, %5, %cst_14 [1] : vector<2x6x8x64xf32> to vector<2x8x64xf32>
    %16 = arith.maximumf %14, %15 : vector<2x8x64xf32>
    %c1_15 = arith.constant 1 : index
    %c0_16 = arith.constant 0 : index
    %c0_17 = arith.constant 0 : index
    %c0_18 = arith.constant 0 : index
    %17 = vector.load %arg6[%c1_15, %c0_16, %c0_17, %c0_18] : memref<2x2x8x64xf32, #tpu.memory_space<vmem>>, vector<1x2x8x64xf32>
    %18 = vector.shape_cast %17 : vector<1x2x8x64xf32> to vector<2x8x64xf32>
    %19 = vector.shape_cast %16 : vector<2x8x64xf32> to vector<1x2x8x64xf32>
    tpu.vector_store %arg6[%c1_15, %c0_16, %c0_17, %c0_18], %19 {strides = array<i32>} : memref<2x2x8x64xf32, #tpu.memory_space<vmem>>, vector<1x2x8x64xf32>,
    %c0_i32_19 = arith.constant 0 : i32
    %20 = arith.cmpi eq, %arg1, %c0_i32_19 : i32
    %21 = arith.extui %20 : i1 to i32
    %c0_i32_20 = arith.constant 0 : i32
    %22 = arith.cmpi ne, %21, %c0_i32_20 : i32
    scf.if %22 {
      %c0_21 = arith.constant 0 : index
      %c0_22 = arith.constant 0 : index
      %c0_23 = arith.constant 0 : index
      %c0_24 = arith.constant 0 : index
      %23 = vector.load %arg6[%c0_21, %c0_22, %c0_23, %c0_24] : memref<2x2x8x64xf32, #tpu.memory_space<vmem>>, vector<1x2x8x64xf32>
      %24 = vector.shape_cast %23 : vector<1x2x8x64xf32> to vector<2x8x64xf32>
      %cst_25 = arith.constant dense<0.000000e+00> : vector<2x64xf32>
      %25 = vector.multi_reduction <add>, %24, %cst_25 [1] : vector<2x8x64xf32> to vector<2x64xf32>
      %cst_26 = arith.constant 0.020833334 : f32
      %26 = vector.broadcast %cst_26 : f32 to vector<2x64xf32>
      %27 = arith.mulf %25, %26 : vector<2x64xf32>
      %c1_27 = arith.constant 1 : index
      %c0_28 = arith.constant 0 : index
      %c0_29 = arith.constant 0 : index
      %c0_30 = arith.constant 0 : index
      %28 = vector.load %arg6[%c1_27, %c0_28, %c0_29, %c0_30] : memref<2x2x8x64xf32, #tpu.memory_space<vmem>>, vector<1x2x8x64xf32>
      %29 = vector.shape_cast %28 : vector<1x2x8x64xf32> to vector<2x8x64xf32>
      %cst_31 = arith.constant dense<0xFF800000> : vector<2x64xf32>
      %30 = vector.multi_reduction <maximumf>, %29, %cst_31 [1] : vector<2x8x64xf32> to vector<2x64xf32>
      %31 = tpu.concatenate %27, %30 in 0 : vector<2x64xf32>, vector<2x64xf32> -> vector<4x64xf32>
      %c0_32 = arith.constant 0 : index
      %c0_33 = arith.constant 0 : index
      %32 = vector.load %arg3[%c0_32, %c0_33] : memref<64x4xf32, #tpu.memory_space<vmem>>, vector<64x4xf32>
      %cst_34 = arith.constant dense<0.000000e+00> : vector<4x4xf32>
      %33 = tpu.matmul %31, %32, %cst_34 {dimension_numbers = #tpu.dot_dimension_numbers<[1], [0], [0], [1], [0, 0, 1, 1], [], []>} : vector<4x64xf32>, vector<64x4xf32>, vector<4x4xf32> -> vector<4x4xf32>
      %cst_35 = arith.constant 0.000000e+00 : f32
      %34 = vector.broadcast %cst_35 : f32 to vector<4x4xf32>
      %35 = arith.maximumf %33, %34 : vector<4x4xf32>
      %c0_36 = arith.constant 0 : index
      %c0_37 = arith.constant 0 : index
      %36 = vector.load %arg4[%c0_36, %c0_37] : memref<4x64xf32, #tpu.memory_space<vmem>>, vector<4x64xf32>
      %cst_38 = arith.constant dense<0.000000e+00> : vector<4x64xf32>
      %37 = tpu.matmul %35, %36, %cst_38 {dimension_numbers = #tpu.dot_dimension_numbers<[1], [0], [0], [1], [0, 0, 1, 1], [], []>} : vector<4x4xf32>, vector<4x64xf32>, vector<4x64xf32> -> vector<4x64xf32>
      %38 = vector.extract_strided_slice %37 {offsets = [0, 0], sizes = [2, 64], strides = [1, 1]} : vector<4x64xf32> to vector<2x64xf32>
      %39 = vector.extract_strided_slice %37 {offsets = [2, 0], sizes = [2, 64], strides = [1, 1]} : vector<4x64xf32> to vector<2x64xf32>
      %40 = arith.addf %38, %39 : vector<2x64xf32>
      %41 = arith.negf %40 : vector<2x64xf32>
      %42 = math.exp %41 : vector<2x64xf32>
      %cst_39 = arith.constant 1.000000e+00 : f32
      %43 = vector.broadcast %cst_39 : f32 to vector<2x64xf32>
      %44 = arith.addf %43, %42 : vector<2x64xf32>
      %45 = arith.divf %43, %44 : vector<2x64xf32>
      %46 = vector.shape_cast %45 : vector<2x64xf32> to vector<2x1x64xf32>
      %c0_40 = arith.constant 0 : index
      %c0_41 = arith.constant 0 : index
      %c0_42 = arith.constant 0 : index
      %47 = vector.load %arg5[%c0_40, %c0_41, %c0_42] : memref<2x1x64xf32, #tpu.memory_space<vmem>>, vector<2x1x64xf32>
      tpu.vector_store %arg5[%c0_40, %c0_41, %c0_42], %46 {strides = array<i32>} : memref<2x1x64xf32, #tpu.memory_space<vmem>>, vector<2x1x64xf32>,
    } else {
    }
    return
  }
  func.func @transform_0(%arg0: i32, %arg1: i32) -> (i32, i32, i32) {
    %c0_i32 = arith.constant 0 : i32
    %c0_i32_0 = arith.constant 0 : i32
    return %arg0, %arg1, %c0_i32 : i32, i32, i32
  }
  func.func @transform_1(%arg0: i32, %arg1: i32) -> (i32, i32) {
    %c0_i32 = arith.constant 0 : i32
    %c0_i32_0 = arith.constant 0 : i32
    %c0_i32_1 = arith.constant 0 : i32
    return %c0_i32, %c0_i32_0 : i32, i32
  }
  func.func @transform_2(%arg0: i32, %arg1: i32) -> (i32, i32) {
    %c0_i32 = arith.constant 0 : i32
    %c0_i32_0 = arith.constant 0 : i32
    %c0_i32_1 = arith.constant 0 : i32
    return %c0_i32, %c0_i32_0 : i32, i32
  }
  func.func @transform_3(%arg0: i32, %arg1: i32) -> (i32, i32, i32) {
    %c0_i32 = arith.constant 0 : i32
    %c0_i32_0 = arith.constant 0 : i32
    %c0_i32_1 = arith.constant 0 : i32
    return %arg0, %c0_i32, %c0_i32_0 : i32, i32, i32
  }
}

</mosaic_0001>

<llo_original>
// kernel: tpu_custom_call.1
$region0: #{tpu_custom_call.1}
  #allocation0 [shape = 'u32[]', space=smem, size = 0x4, offset = 0x4, fixed_abs, tag = 'smem constant byte address 0x4 - core index']
  #allocation1 [shape = 'u32[72,128]{1,0:T(1,128)}', space=vmem, size = 0x9000, scoped, tag = 'internal scratch']
  #allocation2 [shape = 'f32[2,2,8,64]{3,2,1,0:T(8,128)}', space=vmem, size = 0x4000, scoped, tag = 'scratch operand']
  %s0 = inlined_call_operand.hbm [shape: f32[2,48,64], index: 0, kind: input, shape index: {}]
  %s1 = inlined_call_operand.vmem [shape: f32[64,4], index: 1, kind: input, shape index: {}]
  %s2 = inlined_call_operand.vmem [shape: f32[4,64], index: 2, kind: input, shape index: {}]
  %s3 = inlined_call_operand.hbm [shape: f32[2,1,64], index: 3, kind: output, shape index: {}]
  %s4 = sld [smem:[#allocation0]]
  $region34: #{tpu_custom_call.1} parent=0
    _
  %s6 = ssub.s32 1, %s4
  %s7 = scalar_select 0, %s6, %s4
  $region1: #{tpu_custom_call.1} parent=0
    #allocation3 [shape = 'u8[49152]{0}', space=vmem, size = 0xc000, scoped, tag = 'input window, operand 0, single buffered']
    #allocation4 [shape = 's32[1]{0}', space=sflag, size = 0x4, scoped, tag = 'scoped memory for tpu_custom_call.1']
    #allocation5 [shape = 's32[1]{0}', space=sflag, size = 0x4, scoped, tag = 'scoped memory for tpu_custom_call.1']
    #allocation6 [shape = 'u8[1024]{0}', space=vmem, size = 0x400, scoped, tag = 'output window, operand 0, single buffered']
    %8 = vsyncpa [#allocation4], 0
    %9 = vsyncpa [#allocation5], 0
    // Predicated region
    $region2: #{tpu_custom_call.1} parent=1 // pred_check
      _
    $region3: #{tpu_custom_call.1} parent=1 // pred_check_branch
      %11 = sbr.rel (0) target = $region5
    $region4: #{tpu_custom_call.1} parent=1 // pred_region
      %13 = vsyncadd [#allocation4], 0
      %s14 = sshll.u32 %s0, 4
      %s15 = int_to_ptr.hbm [resolvable:$true] %s14
      %s16 = sshll.u32 [#allocation3], 4
      %s17 = int_to_ptr.vmem [resolvable:$true] %s16
      %22 = dma.hbm_to_vmem [thread:$0]  %s15, 1536, %s17, [#allocation4], 128, 128, 8
    $region5: #{tpu_custom_call.1} parent=1 // pred_fallthru
      _
    // Predicated region
    $region6: #{tpu_custom_call.1} parent=1 // pred_check
      _
    $region7: #{tpu_custom_call.1} parent=1 // pred_check_branch
      %24 = sbr.rel (0) target = $region9
    $region8: #{tpu_custom_call.1} parent=1 // pred_region
      _
    $region9: #{tpu_custom_call.1} parent=1 // pred_fallthru
      _
    // Predicated region
    $region10: #{tpu_custom_call.1} parent=1 // pred_check
      _
    $region11: #{tpu_custom_call.1} parent=1 // pred_check_branch
      %26 = sbr.rel (0) target = $region13
    $region12: #{tpu_custom_call.1} parent=1 // pred_region
      _
    $region13: #{tpu_custom_call.1} parent=1 // pred_fallthru
      _
    // Predicated region
    $region14: #{tpu_custom_call.1} parent=1 // pred_check
      _
    $region15: #{tpu_custom_call.1} parent=1 // pred_check_branch
      %28 = sbr.rel (0) target = $region17
    $region16: #{tpu_custom_call.1} parent=1 // pred_region
      %30 = dma.done [#allocation4], 1536
    $region17: #{tpu_custom_call.1} parent=1 // pred_fallthru
      _
    %p31 = scmp.eq.s32.totalorder 0, 0
    // Predicated region
    $region18: #{tpu_custom_call.1} parent=1 // pred_check
      %p32 = pneg %p31
    $region19: #{tpu_custom_call.1} parent=1 // pred_check_branch
      %34 = sbr.rel (%p32) target = $region21
    $region20: #{tpu_custom_call.1} parent=1 // pred_region
      %vm35 = vcmask 523264
      %36 = vst.msk [vmem:[#allocation2] sm:$0xff] %vm35, 0.0
      %37 = vst.msk [vmem:[#allocation2 + $0x8] sm:$0xff] %vm35, 0.0
      %s38 = scalar_lea.vmem [#allocation2], 16
      %39 = vst.msk [vmem:[%s38] sm:$0xff] %vm35, -inf
      %40 = vst.msk [vmem:[%s38 + $0x8] sm:$0xff] %vm35, -inf
    $region21: #{tpu_custom_call.1} parent=1 // pred_fallthru
      _
    %v41 = vld [vmem:[#allocation3] sm:$0xff]
    %v42 = vld [vmem:[#allocation3 + $0x8] sm:$0xff]
    %v43 = vld [vmem:[#allocation3 + $0x10] sm:$0xff]
    %v44 = vld [vmem:[#allocation3 + $0x18] sm:$0xff]
    %v45 = vld [vmem:[#allocation3 + $0x20] sm:$0xff]
    %v46 = vld [vmem:[#allocation3 + $0x28] sm:$0xff]
    %v47 = vld [vmem:[#allocation3 + $0x30] sm:$0xff]
    %v48 = vld [vmem:[#allocation3 + $0x38] sm:$0xff]
    %v49 = vld [vmem:[#allocation3 + $0x40] sm:$0xff]
    %v50 = vld [vmem:[#allocation3 + $0x48] sm:$0xff]
    %v51 = vld [vmem:[#allocation3 + $0x50] sm:$0xff]
    %v52 = vld [vmem:[#allocation3 + $0x58] sm:$0xff]
    %v53 = vld [vmem:[#allocation2] sm:$0xff]
    %v54 = vld [vmem:[#allocation2 + $0x8] sm:$0xff]
    %vm55 = vcmask 523264
    %v56 = vsel %vm55, %v41, 0.0
    %v57 = vsel %vm55, %v42, 0.0
    %v58 = vadd.f32 %v56, %v57
    %v59 = vsel %vm55, %v43, 0.0
    %v60 = vadd.f32 %v58, %v59
    %v61 = vsel %vm55, %v44, 0.0
    %v62 = vadd.f32 %v60, %v61
    %v63 = vsel %vm55, %v45, 0.0
    %v64 = vadd.f32 %v62, %v63
    %v65 = vsel %vm55, %v46, 0.0
    %v66 = vadd.f32 %v64, %v65
    %v67 = vsel %vm55, %v47, 0.0
    %v68 = vsel %vm55, %v48, 0.0
    %v69 = vadd.f32 %v67, %v68
    %v70 = vsel %vm55, %v49, 0.0
    %v71 = vadd.f32 %v69, %v70
    %v72 = vsel %vm55, %v50, 0.0
    %v73 = vadd.f32 %v71, %v72
    %v74 = vsel %vm55, %v51, 0.0
    %v75 = vadd.f32 %v73, %v74
    %v76 = vsel %vm55, %v52, 0.0
    %v77 = vadd.f32 %v75, %v76
    %v78 = vadd.f32 %v53, %v66
    %v79 = vadd.f32 %v54, %v77
    %80 = vst.msk [vmem:[#allocation2] sm:$0xff] %vm55, %v78
    %81 = vst.msk [vmem:[#allocation2 + $0x8] sm:$0xff] %vm55, %v79
    %s82 = scalar_lea.vmem [#allocation2], 16
    %v83 = vld [vmem:[%s82] sm:$0xff]
    %v84 = vld [vmem:[%s82 + $0x8] sm:$0xff]
    %v85 = vsel %vm55, %v41, -inf
    %v86 = vsel %vm55, %v42, -inf
    %v87 = vsel %vm55, %v43, -inf
    %v88 = vmax.f32 %v85, %v87
    %v89 = vsel %vm55, %v44, -inf
    %v90 = vmax.f32 %v86, %v89
    %v91 = vsel %vm55, %v45, -inf
    %v92 = vmax.f32 %v88, %v91
    %v93 = vsel %vm55, %v46, -inf
    %v94 = vmax.f32 %v90, %v93
    %v95 = vmax.f32 %v92, %v94
    %v96 = vsel %vm55, %v47, -inf
    %v97 = vsel %vm55, %v48, -inf
    %v98 = vsel %vm55, %v49, -inf
    %v99 = vmax.f32 %v96, %v98
    %v100 = vsel %vm55, %v50, -inf
    %v101 = vmax.f32 %v97, %v100
    %v102 = vsel %vm55, %v51, -inf
    %v103 = vmax.f32 %v99, %v102
    %v104 = vsel %vm55, %v52, -inf
    %v105 = vmax.f32 %v101, %v104
    %v106 = vmax.f32 %v103, %v105
    %v107 = vmax.f32 %v83, %v95
    %v108 = vmax.f32 %v84, %v106
    %109 = vst.msk [vmem:[%s82] sm:$0xff] %vm55, %v107
    %110 = vst.msk [vmem:[%s82 + $0x8] sm:$0xff] %vm55, %v108
    // Predicated region
    $region22: #{tpu_custom_call.1} parent=1 // pred_check
      %p111 = pneg %p31
    $region23: #{tpu_custom_call.1} parent=1 // pred_check_branch
      %113 = sbr.rel (%p111) target = $region25
    $region24: #{tpu_custom_call.1} parent=1 // pred_region
      %v114 = vld [vmem:[#allocation2] sm:$0xff]
      %v115 = vld [vmem:[#allocation2 + $0x8] sm:$0xff]
      %v116 = vsel %vm55, %v114, 0.0
      %v117 = vrot.slane %v116, 4
      %v118 = vadd.f32 %v116, %v117
      %v119 = vrot.slane %v118, 2
      %v120 = vadd.f32 %v118, %v119
      %v121 = vrot.slane %v120, 1
      %v122 = vadd.f32 %v120, %v121
      %v123 = vsel %vm55, %v115, 0.0
      %v124 = vrot.slane %v123, 4
      %v125 = vadd.f32 %v123, %v124
      %v126 = vrot.slane %v125, 2
      %v127 = vadd.f32 %v125, %v126
      %v128 = vrot.slane %v127, 1
      %v129 = vadd.f32 %v127, %v128
      %v130 = vmul.f32 %v122, 0.020833334
      %v131 = vmul.f32 %v129, 0.020833334
      %v132 = vld [vmem:[%s82] sm:$0xff]
      %v133 = vld [vmem:[%s82 + $0x8] sm:$0xff]
      %v134 = vsel %vm55, %v132, -inf
      %v135 = vrot.slane %v134, 4
      %v136 = vmax.f32 %v134, %v135
      %v137 = vrot.slane %v136, 2
      %v138 = vmax.f32 %v136, %v137
      %v139 = vrot.slane %v138, 1
      %v140 = vmax.f32 %v138, %v139
      %v141 = vsel %vm55, %v133, -inf
      %v142 = vrot.slane %v141, 4
      %v143 = vmax.f32 %v141, %v142
      %v144 = vrot.slane %v143, 2
      %v145 = vmax.f32 %v143, %v144
      %v146 = vrot.slane %v145, 1
      %v147 = vmax.f32 %v145, %v146
      %vm150 = vcmask 1041409
      %v151 = vsel %vm150, %v131, %v130
      %vm155 = vcmask 1043459
      %v156 = vsel %vm155, %v147, %v140
      %vm158 = vcmask 1041408
      %v159 = vsel %vm158, %v151, %v156
      %v160 = vld [vmem:[%s1] sm:$0xff]
      %v161 = vld [vmem:[%s1 + $0x8] sm:$0xff]
      %v162 = vld [vmem:[%s1 + $0x10] sm:$0xff]
      %v163 = vld [vmem:[%s1 + $0x18] sm:$0xff]
      %v164 = vld [vmem:[%s1 + $0x20] sm:$0xff]
      %v165 = vld [vmem:[%s1 + $0x28] sm:$0xff]
      %v166 = vld [vmem:[%s1 + $0x30] sm:$0xff]
      %v167 = vld [vmem:[%s1 + $0x38] sm:$0xff]
      %v169 = vsel %vm55, %v159, 0
      %171 = vmatpush.msra.mxu0 0.0
      %172 = vmatpush.msra.mxu0 0.0
      %173 = vmatpush.msra.mxu0 0.0
      %174 = vmatpush.msra.mxu0 0.0
      %175 = vmatpush.msra.mxu0 0.0
      %176 = vmatpush.msra.mxu0 0.0
      %177 = vmatpush.msra.mxu0 0.0
      %178 = vmatpush.msra.mxu0 0.0
      %179 = vmatpush.msra.mxu0 %v167
      %180 = vmatpush.msra.mxu0 %v166
      %181 = vmatpush.msra.mxu0 %v165
      %182 = vmatpush.msra.mxu0 %v164
      %183 = vmatpush.msra.mxu0 %v163
      %184 = vmatpush.msra.mxu0 %v162
      %185 = vmatpush.msra.mxu0 %v161
      %186 = vmatpush.msra.mxu0 %v160
      %187 = vmatmul.f32.gmra.mxu0 %v169
      %v188 = vpop.f32.mrf.mxu0
      %v189 = vadd.f32 0.0, %v188
      %190 = vdwg.mxu0
      %v191 = vmax.f32 %v189, 0.0
      %v192 = vld [vmem:[%s2] sm:$0xf]
      %vm193 = vcmask 31744
      %v195 = vsel %vm193, %v191, 0
      %vm197 = vcmask 1043456
      %v199 = vsel %vm197, %v192, 0
      %201 = vmatpush.msra.mxu0 0.0
      %202 = vmatpush.msra.mxu0 0.0
      %203 = vmatpush.msra.mxu0 0.0
      %204 = vmatpush.msra.mxu0 0.0
      %205 = vmatpush.msra.mxu0 0.0
      %206 = vmatpush.msra.mxu0 0.0
      %207 = vmatpush.msra.mxu0 0.0
      %208 = vmatpush.msra.mxu0 0.0
      %209 = vmatpush.msra.mxu0 0.0
      %210 = vmatpush.msra.mxu0 0.0
      %211 = vmatpush.msra.mxu0 0.0
      %212 = vmatpush.msra.mxu0 0.0
      %213 = vmatpush.msra.mxu0 0.0
      %214 = vmatpush.msra.mxu0 0.0
      %215 = vmatpush.msra.mxu0 0.0
      %216 = vmatpush.msra.mxu0 %v199
      %217 = vmatmul.f32.gmra.mxu0 %v195
      %v218 = vpop.f32.mrf.mxu0
      %v219 = vadd.f32 0.0, %v218
      %220 = vdwg.mxu0
      %v222 = vrot.slane %v219, 2
      %v224 = vadd.f32 %v219, %v222
      %v225 = vxor.u32 %v224, 2147483648
      %v226 = vmul.f32 %v225, 1.442695
      %v227 = vpow.pop %v226
      %v228 = vadd.f32 %v227, 1.0
      %v229 = vrcp.pop %v228
      %v230 = vmul.f32 %v228, %v229
      %v231 = vsub.f32 1.0, %v230
      %v232 = vmul.f32 %v229, %v231
      %v233 = vadd.f32 %v229, %v232
      %vm234 = vweird.f32 %v228
      %vm235 = vweird.f32 %v229
      %vm236 = vmor %vm234, %vm235
      %v237 = vsel %vm236, %v229, %v233
      %v238 = vand.u32 2147483647, %v228
      %vm239 = vcmp.eq.f32.partialorder %v238, 8.507059e+37
      %v240 = vand.u32 %v228, 2147483648
      %v241 = vor.u32 1.1754944e-38, %v240
      %v242 = vsel %vm239, %v241, %v237
      %v243 = vmul.f32 1.0, %v242
      %v245 = vrot.slane %v243, 1
      %vm247 = vcmask 516096
      %248 = vst.msk [vmem:[#allocation6] sm:$0x1] %vm247, %v243
      %249 = vst.msk [vmem:[#allocation6 + $0x1] sm:$0x1] %vm247, %v245
    $region25: #{tpu_custom_call.1} parent=1 // pred_fallthru
      _
    // Predicated region
    $region26: #{tpu_custom_call.1} parent=1 // pred_check
      _
    $region27: #{tpu_custom_call.1} parent=1 // pred_check_branch
      %251 = sbr.rel (0) target = $region29
    $region28: #{tpu_custom_call.1} parent=1 // pred_region
      %253 = vsyncadd [#allocation5], 0
      %s254 = sshll.u32 [#allocation6], 4
      %s255 = int_to_ptr.vmem [resolvable:$true] %s254
      %s256 = sshll.u32 %s3, 4
      %s257 = int_to_ptr.hbm [resolvable:$true] %s256
      %262 = dma.vmem_to_hbm [thread:$0]  %s255, 32, %s257, [#allocation5], 16, 16, 1
    $region29: #{tpu_custom_call.1} parent=1 // pred_fallthru
      _
    // Predicated region
    $region30: #{tpu_custom_call.1} parent=1 // pred_check
      _
    $region31: #{tpu_custom_call.1} parent=1 // pred_check_branch
      %264 = sbr.rel (0) target = $region33
    $region32: #{tpu_custom_call.1} parent=1 // pred_region
      %266 = dma.done [#allocation5], 32
    $region33: #{tpu_custom_call.1} parent=1 // pred_fallthru
      _
    %267 = vsyncpa [#allocation4], 1
    %268 = vsyncpa [#allocation5], 1

</llo_original>
